<compile_context>
chip_gen: v7x
topology: tpu7x:2x2x1
jax: 0.10.0
libtpu: 0.0.40
codegen_flags: <defaults>
</compile_context>

<pallas_src>
import jax
import jax.numpy as jnp
from jax.experimental import pallas as pl
from jax.experimental.pallas import tpu as pltpu

LANE = 128


def _round_up(d, m=LANE):
    return ((d + m - 1) // m) * m


# ----------------------------- Pallas kernel ------------------------------ #
def _lpn_kernel(gl_ref, gp_ref, y0_ref, y0t_ref,
                w1l_ref, b1l_ref, w2l_ref, b2l_ref,
                w1p_ref, b1p_ref, w2p_ref, b2p_ref,
                yl_ref, zl_ref, yp_ref, zp_ref):
    """Fused LPN forward: two GAE branches x two GCN layers, one launch."""

    def sigmoid(x):
        # exp and approximate reciprocal both issue on the EUP slot.
        return pl.reciprocal(1.0 + jnp.exp(-x), approx=True)

    gl = gl_ref[...]        # (n_lnc, n_lnc)
    gp = gp_ref[...]        # (n_pro, n_pro)
    y0 = y0_ref[...]        # (n_lnc, n_pro)
    y0t = y0t_ref[...]      # (n_pro, n_lnc)

    # ---------------- lnc branch: features = y0 ----------------
    h = jnp.dot(y0, w1l_ref[...], preferred_element_type=jnp.float32) + b1l_ref[...]
    zl = jnp.maximum(jnp.dot(gl, h, preferred_element_type=jnp.float32), 0.0)
    h = jnp.dot(zl, w2l_ref[...], preferred_element_type=jnp.float32) + b2l_ref[...]
    yl = sigmoid(jnp.dot(gl, h, preferred_element_type=jnp.float32))

    # ---------------- pro branch: features = y0.T ----------------
    h = jnp.dot(y0t, w1p_ref[...], preferred_element_type=jnp.float32) + b1p_ref[...]
    zp = jnp.maximum(jnp.dot(gp, h, preferred_element_type=jnp.float32), 0.0)
    h = jnp.dot(zp, w2p_ref[...], preferred_element_type=jnp.float32) + b2p_ref[...]
    yp = sigmoid(jnp.dot(gp, h, preferred_element_type=jnp.float32))

    # Full-lane-width (128) stores: no masked vst.
    yl_ref[...] = yl.astype(yl_ref.dtype)
    zl_ref[...] = zl.astype(zl_ref.dtype)
    yp_ref[...] = yp.astype(yp_ref.dtype)
    zp_ref[...] = zp.astype(zp_ref.dtype)


# ------------------------------ host wrappers ------------------------------ #
def _pad_to(x, rows, cols):
    return jnp.pad(x, ((0, rows - x.shape[0]), (0, cols - x.shape[1])))


def _pad_gae_params(p):
    """Zero-pad W1/b1/W2/b2 so the hidden and output dims are 128-lane dense."""
    f_in, hidden = p["w1"].shape
    f_out = p["w2"].shape[1]
    h_p, o_p = _round_up(hidden), _round_up(f_out)
    w1 = _pad_to(p["w1"], f_in, h_p)                       # (F_in, h_p)
    b1 = _pad_to(p["b1"].reshape(1, hidden), 1, h_p)       # (1,    h_p)
    w2 = _pad_to(p["w2"], h_p, o_p)                        # (h_p,  o_p)
    b2 = _pad_to(p["b2"].reshape(1, f_out), 1, o_p)        # (1,    o_p)
    return w1, b1, w2, b2


def lpn_forward(params, graph_lnc, graph_pro, y0):
    """LPN.forward(y0) -> (yl, zl, yp, zp); a single fused Pallas kernel."""
    n_lnc, n_pro = y0.shape
    hidden = params["lnc"]["w1"].shape[1]
    h_p = _round_up(hidden)
    ol_p = _round_up(n_pro)    # lnc-branch decoder width (padded)
    op_p = _round_up(n_lnc)    # pro-branch decoder width (padded)

    w1l, b1l, w2l, b2l = _pad_gae_params(params["lnc"])
    w1p, b1p, w2p, b2p = _pad_gae_params(params["pro"])
    y0t = y0.T  # fused into the tiny XLA prologue together with the pads

    vmem = pl.BlockSpec(memory_space=pltpu.MemorySpace.VMEM)
    out_shape = (
        jax.ShapeDtypeStruct((n_lnc, ol_p), jnp.float32),   # yl (lane-padded)
        jax.ShapeDtypeStruct((n_lnc, h_p), jnp.float32),    # zl (lane-padded)
        jax.ShapeDtypeStruct((n_pro, op_p), jnp.float32),   # yp (lane-padded)
        jax.ShapeDtypeStruct((n_pro, h_p), jnp.float32),    # zp (lane-padded)
    )
    yl_p, zl_p, yp_p, zp_p = pl.pallas_call(
        _lpn_kernel,
        out_shape=out_shape,
        in_specs=[vmem] * 12,
        out_specs=(vmem, vmem, vmem, vmem),
    )(graph_lnc, graph_pro, y0, y0t,
      w1l, b1l, w2l, b2l, w1p, b1p, w2p, b2p)

    # Slice off lane padding (zeros for z*, sigmoid(0)=0.5 for y*).
    return (yl_p[:, :n_pro], zl_p[:, :hidden],
            yp_p[:, :n_lnc], zp_p[:, :hidden])


def init_gae_params(key, hidden, size):
    k1, k2 = jax.random.split(key)
    scale1 = 1.0 / jnp.sqrt(jnp.float32(size))
    scale2 = 1.0 / jnp.sqrt(jnp.float32(hidden))
    return {
        "w1": jax.random.normal(k1, (size, hidden), jnp.float32) * scale1,
        "b1": jnp.zeros((hidden,), jnp.float32),
        "w2": jax.random.normal(k2, (hidden, size), jnp.float32) * scale2,
        "b2": jnp.zeros((size,), jnp.float32),
    }


# -------------------------- pure-JAX reference ----------------------------- #
def _gae_ref(p, adj, x):
    z = jax.nn.relu(adj @ (x @ p["w1"] + p["b1"]))
    y = jax.nn.sigmoid(adj @ (z @ p["w2"] + p["b2"]))
    return y, z


def _lpn_ref(params, graph_lnc, graph_pro, y0):
    yl, zl = _gae_ref(params["lnc"], graph_lnc, y0)
    yp, zp = _gae_ref(params["pro"], graph_pro, y0.T)
    return yl, zl, yp, zp


# --------------------------------- main ------------------------------------ #
if __name__ == "__main__":
    key = jax.random.PRNGKey(0)
    k_y0, k_gl, k_gp, k_pl, k_pp = jax.random.split(key, 5)

    hidden = 32
    n_lnc, n_pro = 16, 8          # lpi_torch.shape = (n_lnc, n_pro)

    # interaction matrix (features for both branches)
    y0 = (jax.random.uniform(k_y0, (n_lnc, n_pro)) > 0.5).astype(jnp.float32)

    # symmetric, row-normalized similarity graphs
    def make_graph(k, n):
        a = jax.random.uniform(k, (n, n), jnp.float32)
        a = 0.5 * (a + a.T) + jnp.eye(n, dtype=jnp.float32)
        return a / jnp.sum(a, axis=1, keepdims=True)

    graph_lnc = make_graph(k_gl, n_lnc)   # (n_lnc, n_lnc)
    graph_pro = make_graph(k_gp, n_pro)   # (n_pro, n_pro)

    params = {
        "lnc": init_gae_params(k_pl, hidden, n_pro),   # GAE(hidden, lpi.shape[1])
        "pro": init_gae_params(k_pp, hidden, n_lnc),   # GAE(hidden, lpi.shape[0])
    }

    fwd = jax.jit(lpn_forward)
    yl, zl, yp, zp = fwd(params, graph_lnc, graph_pro, y0)
    jax.block_until_ready((yl, zl, yp, zp))

    # shape / sanity checks against the pure-JAX reference
    assert yl.shape == (n_lnc, n_pro) and zl.shape == (n_lnc, hidden)
    assert yp.shape == (n_pro, n_lnc) and zp.shape == (n_pro, hidden)
    ryl, rzl, ryp, rzp = _lpn_ref(params, graph_lnc, graph_pro, y0)
    for got, ref in ((yl, ryl), (zl, rzl), (yp, ryp), (zp, rzp)):
        assert bool(jnp.all(jnp.isfinite(got)))
        assert bool(jnp.allclose(got, ref, rtol=1e-2, atol=1e-2))

    print("KERNEL_OK")
</pallas_src>

<mosaic_0001>
module attributes {stable_mosaic.version = 11 : i64} {
  func.func @_lpn_kernel(%arg0: memref<16x16xf32, #tpu.memory_space<vmem>>, %arg1: memref<8x8xf32, #tpu.memory_space<vmem>>, %arg2: memref<16x8xf32, #tpu.memory_space<vmem>>, %arg3: memref<8x16xf32, #tpu.memory_space<vmem>>, %arg4: memref<8x128xf32, #tpu.memory_space<vmem>>, %arg5: memref<1x128xf32, #tpu.memory_space<vmem>>, %arg6: memref<128x128xf32, #tpu.memory_space<vmem>>, %arg7: memref<1x128xf32, #tpu.memory_space<vmem>>, %arg8: memref<16x128xf32, #tpu.memory_space<vmem>>, %arg9: memref<1x128xf32, #tpu.memory_space<vmem>>, %arg10: memref<128x128xf32, #tpu.memory_space<vmem>>, %arg11: memref<1x128xf32, #tpu.memory_space<vmem>>, %arg12: memref<16x128xf32, #tpu.memory_space<vmem>>, %arg13: memref<16x128xf32, #tpu.memory_space<vmem>>, %arg14: memref<8x128xf32, #tpu.memory_space<vmem>>, %arg15: memref<8x128xf32, #tpu.memory_space<vmem>>) attributes {dimension_semantics = [], scalar_prefetch = 0 : i64, scratch_operands = 0 : i64, tpu.core_type = #tpu.core_type<tc>} {
    %c0 = arith.constant 0 : index
    %c0_0 = arith.constant 0 : index
    %0 = vector.load %arg0[%c0, %c0_0] : memref<16x16xf32, #tpu.memory_space<vmem>>, vector<16x16xf32>
    %c0_1 = arith.constant 0 : index
    %c0_2 = arith.constant 0 : index
    %1 = vector.load %arg1[%c0_1, %c0_2] : memref<8x8xf32, #tpu.memory_space<vmem>>, vector<8x8xf32>
    %c0_3 = arith.constant 0 : index
    %c0_4 = arith.constant 0 : index
    %2 = vector.load %arg2[%c0_3, %c0_4] : memref<16x8xf32, #tpu.memory_space<vmem>>, vector<16x8xf32>
    %c0_5 = arith.constant 0 : index
    %c0_6 = arith.constant 0 : index
    %3 = vector.load %arg3[%c0_5, %c0_6] : memref<8x16xf32, #tpu.memory_space<vmem>>, vector<8x16xf32>
    %c0_7 = arith.constant 0 : index
    %c0_8 = arith.constant 0 : index
    %4 = vector.load %arg4[%c0_7, %c0_8] : memref<8x128xf32, #tpu.memory_space<vmem>>, vector<8x128xf32>
    %cst = arith.constant dense<0.000000e+00> : vector<16x128xf32>
    %5 = tpu.matmul %2, %4, %cst {dimension_numbers = #tpu.dot_dimension_numbers<[1], [0], [0], [1], [0, 0, 1, 1], [], []>} : vector<16x8xf32>, vector<8x128xf32>, vector<16x128xf32> -> vector<16x128xf32>
    %c0_9 = arith.constant 0 : index
    %c0_10 = arith.constant 0 : index
    %6 = vector.load %arg5[%c0_9, %c0_10] : memref<1x128xf32, #tpu.memory_space<vmem>>, vector<1x128xf32>
    %7 = vector.broadcast %6 : vector<1x128xf32> to vector<16x128xf32>
    %8 = arith.addf %5, %7 : vector<16x128xf32>
    %cst_11 = arith.constant dense<0.000000e+00> : vector<16x128xf32>
    %9 = tpu.matmul %0, %8, %cst_11 {dimension_numbers = #tpu.dot_dimension_numbers<[1], [0], [0], [1], [0, 0, 1, 1], [], []>} : vector<16x16xf32>, vector<16x128xf32>, vector<16x128xf32> -> vector<16x128xf32>
    %cst_12 = arith.constant 0.000000e+00 : f32
    %10 = vector.broadcast %cst_12 : f32 to vector<16x128xf32>
    %11 = arith.maximumf %9, %10 : vector<16x128xf32>
    %c0_13 = arith.constant 0 : index
    %c0_14 = arith.constant 0 : index
    %12 = vector.load %arg6[%c0_13, %c0_14] : memref<128x128xf32, #tpu.memory_space<vmem>>, vector<128x128xf32>
    %cst_15 = arith.constant dense<0.000000e+00> : vector<16x128xf32>
    %13 = tpu.matmul %11, %12, %cst_15 {dimension_numbers = #tpu.dot_dimension_numbers<[1], [0], [0], [1], [0, 0, 1, 1], [], []>} : vector<16x128xf32>, vector<128x128xf32>, vector<16x128xf32> -> vector<16x128xf32>
    %c0_16 = arith.constant 0 : index
    %c0_17 = arith.constant 0 : index
    %14 = vector.load %arg7[%c0_16, %c0_17] : memref<1x128xf32, #tpu.memory_space<vmem>>, vector<1x128xf32>
    %15 = vector.broadcast %14 : vector<1x128xf32> to vector<16x128xf32>
    %16 = arith.addf %13, %15 : vector<16x128xf32>
    %cst_18 = arith.constant dense<0.000000e+00> : vector<16x128xf32>
    %17 = tpu.matmul %0, %16, %cst_18 {dimension_numbers = #tpu.dot_dimension_numbers<[1], [0], [0], [1], [0, 0, 1, 1], [], []>} : vector<16x16xf32>, vector<16x128xf32>, vector<16x128xf32> -> vector<16x128xf32>
    %cst_19 = arith.constant 0.000000e+00 : f32
    %18 = vector.broadcast %cst_19 : f32 to vector<16x128xf32>
    %19 = arith.subf %18, %17 : vector<16x128xf32>
    %20 = math.exp %19 : vector<16x128xf32>
    %cst_20 = arith.constant 1.000000e+00 : f32
    %21 = vector.broadcast %cst_20 : f32 to vector<16x128xf32>
    %22 = arith.addf %21, %20 : vector<16x128xf32>
    %23 = tpu.reciprocal %22 {approx = true} : vector<16x128xf32> -> vector<16x128xf32>
    %c0_21 = arith.constant 0 : index
    %c0_22 = arith.constant 0 : index
    %24 = vector.load %arg8[%c0_21, %c0_22] : memref<16x128xf32, #tpu.memory_space<vmem>>, vector<16x128xf32>
    %cst_23 = arith.constant dense<0.000000e+00> : vector<8x128xf32>
    %25 = tpu.matmul %3, %24, %cst_23 {dimension_numbers = #tpu.dot_dimension_numbers<[1], [0], [0], [1], [0, 0, 1, 1], [], []>} : vector<8x16xf32>, vector<16x128xf32>, vector<8x128xf32> -> vector<8x128xf32>
    %c0_24 = arith.constant 0 : index
    %c0_25 = arith.constant 0 : index
    %26 = vector.load %arg9[%c0_24, %c0_25] : memref<1x128xf32, #tpu.memory_space<vmem>>, vector<1x128xf32>
    %27 = vector.broadcast %26 : vector<1x128xf32> to vector<8x128xf32>
    %28 = arith.addf %25, %27 : vector<8x128xf32>
    %cst_26 = arith.constant dense<0.000000e+00> : vector<8x128xf32>
    %29 = tpu.matmul %1, %28, %cst_26 {dimension_numbers = #tpu.dot_dimension_numbers<[1], [0], [0], [1], [0, 0, 1, 1], [], []>} : vector<8x8xf32>, vector<8x128xf32>, vector<8x128xf32> -> vector<8x128xf32>
    %cst_27 = arith.constant 0.000000e+00 : f32
    %30 = vector.broadcast %cst_27 : f32 to vector<8x128xf32>
    %31 = arith.maximumf %29, %30 : vector<8x128xf32>
    %c0_28 = arith.constant 0 : index
    %c0_29 = arith.constant 0 : index
    %32 = vector.load %arg10[%c0_28, %c0_29] : memref<128x128xf32, #tpu.memory_space<vmem>>, vector<128x128xf32>
    %cst_30 = arith.constant dense<0.000000e+00> : vector<8x128xf32>
    %33 = tpu.matmul %31, %32, %cst_30 {dimension_numbers = #tpu.dot_dimension_numbers<[1], [0], [0], [1], [0, 0, 1, 1], [], []>} : vector<8x128xf32>, vector<128x128xf32>, vector<8x128xf32> -> vector<8x128xf32>
    %c0_31 = arith.constant 0 : index
    %c0_32 = arith.constant 0 : index
    %34 = vector.load %arg11[%c0_31, %c0_32] : memref<1x128xf32, #tpu.memory_space<vmem>>, vector<1x128xf32>
    %35 = vector.broadcast %34 : vector<1x128xf32> to vector<8x128xf32>
    %36 = arith.addf %33, %35 : vector<8x128xf32>
    %cst_33 = arith.constant dense<0.000000e+00> : vector<8x128xf32>
    %37 = tpu.matmul %1, %36, %cst_33 {dimension_numbers = #tpu.dot_dimension_numbers<[1], [0], [0], [1], [0, 0, 1, 1], [], []>} : vector<8x8xf32>, vector<8x128xf32>, vector<8x128xf32> -> vector<8x128xf32>
    %cst_34 = arith.constant 0.000000e+00 : f32
    %38 = vector.broadcast %cst_34 : f32 to vector<8x128xf32>
    %39 = arith.subf %38, %37 : vector<8x128xf32>
    %40 = math.exp %39 : vector<8x128xf32>
    %cst_35 = arith.constant 1.000000e+00 : f32
    %41 = vector.broadcast %cst_35 : f32 to vector<8x128xf32>
    %42 = arith.addf %41, %40 : vector<8x128xf32>
    %43 = tpu.reciprocal %42 {approx = true} : vector<8x128xf32> -> vector<8x128xf32>
    %c0_36 = arith.constant 0 : index
    %c0_37 = arith.constant 0 : index
    %44 = vector.load %arg12[%c0_36, %c0_37] : memref<16x128xf32, #tpu.memory_space<vmem>>, vector<16x128xf32>
    tpu.vector_store %arg12[%c0_36, %c0_37], %23 {strides = array<i32>} : memref<16x128xf32, #tpu.memory_space<vmem>>, vector<16x128xf32>,
    %c0_38 = arith.constant 0 : index
    %c0_39 = arith.constant 0 : index
    %45 = vector.load %arg13[%c0_38, %c0_39] : memref<16x128xf32, #tpu.memory_space<vmem>>, vector<16x128xf32>
    tpu.vector_store %arg13[%c0_38, %c0_39], %11 {strides = array<i32>} : memref<16x128xf32, #tpu.memory_space<vmem>>, vector<16x128xf32>,
    %c0_40 = arith.constant 0 : index
    %c0_41 = arith.constant 0 : index
    %46 = vector.load %arg14[%c0_40, %c0_41] : memref<8x128xf32, #tpu.memory_space<vmem>>, vector<8x128xf32>
    tpu.vector_store %arg14[%c0_40, %c0_41], %43 {strides = array<i32>} : memref<8x128xf32, #tpu.memory_space<vmem>>, vector<8x128xf32>,
    %c0_42 = arith.constant 0 : index
    %c0_43 = arith.constant 0 : index
    %47 = vector.load %arg15[%c0_42, %c0_43] : memref<8x128xf32, #tpu.memory_space<vmem>>, vector<8x128xf32>
    tpu.vector_store %arg15[%c0_42, %c0_43], %31 {strides = array<i32>} : memref<8x128xf32, #tpu.memory_space<vmem>>, vector<8x128xf32>,
    return
  }
}

</mosaic_0001>

<llo_original>
// kernel: lpn_forward.1
$region0: #{lpn_forward.1}
  #allocation0 [shape = 'u32[]', space=smem, size = 0x4, offset = 0x4, fixed_abs, tag = 'smem constant byte address 0x4 - core index']
  #allocation1 [shape = 'u32[144,128]{1,0:T(1,128)}', space=vmem, size = 0x12000, scoped, tag = 'internal scratch']
  %s0 = inlined_call_operand.vmem [shape: f32[16,16], index: 0, kind: input, shape index: {}]
  %s1 = inlined_call_operand.vmem [shape: f32[8,8], index: 1, kind: input, shape index: {}]
  %s2 = inlined_call_operand.vmem [shape: f32[16,8], index: 2, kind: input, shape index: {}]
  %s3 = inlined_call_operand.vmem [shape: f32[8,16], index: 3, kind: input, shape index: {}]
  %s4 = inlined_call_operand.vmem [shape: f32[8,128], index: 4, kind: input, shape index: {}]
  %s5 = inlined_call_operand.vmem [shape: f32[1,128], index: 5, kind: input, shape index: {}]
  %s6 = inlined_call_operand.vmem [shape: f32[128,128], index: 6, kind: input, shape index: {}]
  %s7 = inlined_call_operand.vmem [shape: f32[1,128], index: 7, kind: input, shape index: {}]
  %s8 = inlined_call_operand.vmem [shape: f32[16,128], index: 8, kind: input, shape index: {}]
  %s9 = inlined_call_operand.vmem [shape: f32[1,128], index: 9, kind: input, shape index: {}]
  %s10 = inlined_call_operand.vmem [shape: f32[128,128], index: 10, kind: input, shape index: {}]
  %s11 = inlined_call_operand.vmem [shape: f32[1,128], index: 11, kind: input, shape index: {}]
  %s12 = inlined_call_operand.vmem [shape: f32[16,128], index: 12, kind: output, shape index: {0}]
  %s13 = inlined_call_operand.hbm [shape: f32[16,128], index: 13, kind: output, shape index: {1}]
  %s14 = inlined_call_operand.hbm [shape: f32[8,128], index: 14, kind: output, shape index: {2}]
  %s15 = inlined_call_operand.hbm [shape: f32[8,128], index: 15, kind: output, shape index: {3}]
  %16 = xla_tuple %s12, %s13, %s14, %s15
  %s17 = sld [smem:[#allocation0]]
  $region82: #{lpn_forward.1} parent=0
    _
  %s19 = ssub.s32 1, %s17
  %s20 = scalar_select 0, %s19, %s17
  $region1: #{lpn_forward.1} parent=0
    #allocation2 [shape = 'u8[8192]{0}', space=vmem, size = 0x2000, scoped, tag = 'output window, operand 1, single buffered']
    #allocation3 [shape = 's32[1]{0}', space=sflag, size = 0x4, scoped, tag = 'scoped memory for lpn_forward.1']
    #allocation4 [shape = 'u8[4096]{0}', space=vmem, size = 0x1000, scoped, tag = 'output window, operand 2, single buffered']
    #allocation5 [shape = 's32[1]{0}', space=sflag, size = 0x4, scoped, tag = 'scoped memory for lpn_forward.1']
    #allocation6 [shape = 'u8[4096]{0}', space=vmem, size = 0x1000, scoped, tag = 'output window, operand 3, single buffered']
    %21 = vsyncpa [#allocation3], 0
    %22 = vsyncpa [#allocation5], 0
    // Predicated region
    $region2: #{lpn_forward.1} parent=1 // pred_check
      _
    $region3: #{lpn_forward.1} parent=1 // pred_check_branch
      %24 = sbr.rel (0) target = $region5
    $region4: #{lpn_forward.1} parent=1 // pred_region
      _
    $region5: #{lpn_forward.1} parent=1 // pred_fallthru
      _
    // Predicated region
    $region6: #{lpn_forward.1} parent=1 // pred_check
      _
    $region7: #{lpn_forward.1} parent=1 // pred_check_branch
      %26 = sbr.rel (0) target = $region9
    $region8: #{lpn_forward.1} parent=1 // pred_region
      _
    $region9: #{lpn_forward.1} parent=1 // pred_fallthru
      _
    // Predicated region
    $region10: #{lpn_forward.1} parent=1 // pred_check
      _
    $region11: #{lpn_forward.1} parent=1 // pred_check_branch
      %28 = sbr.rel (0) target = $region13
    $region12: #{lpn_forward.1} parent=1 // pred_region
      _
    $region13: #{lpn_forward.1} parent=1 // pred_fallthru
      _
    // Predicated region
    $region14: #{lpn_forward.1} parent=1 // pred_check
      _
    $region15: #{lpn_forward.1} parent=1 // pred_check_branch
      %30 = sbr.rel (0) target = $region17
    $region16: #{lpn_forward.1} parent=1 // pred_region
      _
    $region17: #{lpn_forward.1} parent=1 // pred_fallthru
      _
    // Predicated region
    $region18: #{lpn_forward.1} parent=1 // pred_check
      _
    $region19: #{lpn_forward.1} parent=1 // pred_check_branch
      %32 = sbr.rel (0) target = $region21
    $region20: #{lpn_forward.1} parent=1 // pred_region
      _
    $region21: #{lpn_forward.1} parent=1 // pred_fallthru
      _
    // Predicated region
    $region22: #{lpn_forward.1} parent=1 // pred_check
      _
    $region23: #{lpn_forward.1} parent=1 // pred_check_branch
      %34 = sbr.rel (0) target = $region25
    $region24: #{lpn_forward.1} parent=1 // pred_region
      _
    $region25: #{lpn_forward.1} parent=1 // pred_fallthru
      _
    // Predicated region
    $region26: #{lpn_forward.1} parent=1 // pred_check
      _
    $region27: #{lpn_forward.1} parent=1 // pred_check_branch
      %36 = sbr.rel (0) target = $region29
    $region28: #{lpn_forward.1} parent=1 // pred_region
      _
    $region29: #{lpn_forward.1} parent=1 // pred_fallthru
      _
    // Predicated region
    $region30: #{lpn_forward.1} parent=1 // pred_check
      _
    $region31: #{lpn_forward.1} parent=1 // pred_check_branch
      %38 = sbr.rel (0) target = $region33
    $region32: #{lpn_forward.1} parent=1 // pred_region
      _
    $region33: #{lpn_forward.1} parent=1 // pred_fallthru
      _
    // Predicated region
    $region34: #{lpn_forward.1} parent=1 // pred_check
      _
    $region35: #{lpn_forward.1} parent=1 // pred_check_branch
      %40 = sbr.rel (0) target = $region37
    $region36: #{lpn_forward.1} parent=1 // pred_region
      _
    $region37: #{lpn_forward.1} parent=1 // pred_fallthru
      _
    // Predicated region
    $region38: #{lpn_forward.1} parent=1 // pred_check
      _
    $region39: #{lpn_forward.1} parent=1 // pred_check_branch
      %42 = sbr.rel (0) target = $region41
    $region40: #{lpn_forward.1} parent=1 // pred_region
      _
    $region41: #{lpn_forward.1} parent=1 // pred_fallthru
      _
    // Predicated region
    $region42: #{lpn_forward.1} parent=1 // pred_check
      _
    $region43: #{lpn_forward.1} parent=1 // pred_check_branch
      %44 = sbr.rel (0) target = $region45
    $region44: #{lpn_forward.1} parent=1 // pred_region
      _
    $region45: #{lpn_forward.1} parent=1 // pred_fallthru
      _
    // Predicated region
    $region46: #{lpn_forward.1} parent=1 // pred_check
      _
    $region47: #{lpn_forward.1} parent=1 // pred_check_branch
      %46 = sbr.rel (0) target = $region49
    $region48: #{lpn_forward.1} parent=1 // pred_region
      _
    $region49: #{lpn_forward.1} parent=1 // pred_fallthru
      _
    %v47 = vld [vmem:[%s0] sm:$0xff]
    %v48 = vld [vmem:[%s0 + $0x8] sm:$0xff]
    %v49 = vld [vmem:[%s1] sm:$0xff]
    %v50 = vld [vmem:[%s2] sm:$0xff]
    %v51 = vld [vmem:[%s2 + $0x8] sm:$0xff]
    %v52 = vld [vmem:[%s3] sm:$0xff]
    %v53 = vld [vmem:[%s4] sm:$0xff]
    %v54 = vld [vmem:[%s5] sm:$0x1]
    %v56 = vlaneseq
    %v57 = vshrl.u32 %v56, 7
    %v58 = vsub.s32 0, %v57
    %v59 = vrot.slane %v54, %v58
    %vm61 = vcmask 64512
    %v63 = vsel %vm61, %v50, 0
    %v66 = vsel %vm61, %v51, 0
    %68 = vmatprep.subr.mxu0 0.0
    %69 = vmatpush1.msra.mxu0 %v53
    %70 = vmatprep.subr.mxu0 0.0
    %71 = vmatpush1.msra.mxu0 0.0
    %72 = vmatprep.subr.mxu0 0.0
    %73 = vmatpush1.msra.mxu0 0.0
    %74 = vmatprep.subr.mxu0 0.0
    %75 = vmatpush1.msra.mxu0 0.0
    %76 = vmatprep.subr.mxu0 0.0
    %77 = vmatpush1.msra.mxu0 0.0
    %78 = vmatprep.subr.mxu0 0.0
    %79 = vmatpush1.msra.mxu0 0.0
    %80 = vmatprep.subr.mxu0 0.0
    %81 = vmatpush1.msra.mxu0 0.0
    %82 = vmatprep.subr.mxu0 0.0
    %83 = vmatpush1.msra.mxu0 0.0
    %84 = vmatprep.subr.mxu0 0.0
    %85 = vmatpush1.msra.mxu0 0.0
    %86 = vmatprep.subr.mxu0 0.0
    %87 = vmatpush1.msra.mxu0 0.0
    %88 = vmatprep.subr.mxu0 0.0
    %89 = vmatpush1.msra.mxu0 0.0
    %90 = vmatprep.subr.mxu0 0.0
    %91 = vmatpush1.msra.mxu0 0.0
    %92 = vmatprep.subr.mxu0 0.0
    %93 = vmatpush1.msra.mxu0 0.0
    %94 = vmatprep.subr.mxu0 0.0
    %95 = vmatpush1.msra.mxu0 0.0
    %96 = vmatprep.subr.mxu0 0.0
    %97 = vmatpush1.msra.mxu0 0.0
    %98 = vmatprep.subr.mxu0 0.0
    %99 = vmatpush1.msra.mxu0 0.0
    %100 = vmatprep.subr.mxu0 0.0
    %101 = vmatpush1.msra.mxu0 0.0
    %102 = vmatprep.subr.mxu0 0.0
    %103 = vmatpush1.msra.mxu0 0.0
    %104 = vmatprep.subr.mxu0 0.0
    %105 = vmatpush1.msra.mxu0 0.0
    %106 = vmatprep.subr.mxu0 0.0
    %107 = vmatpush1.msra.mxu0 0.0
    %108 = vmatprep.subr.mxu0 0.0
    %109 = vmatpush1.msra.mxu0 0.0
    %110 = vmatprep.subr.mxu0 0.0
    %111 = vmatpush1.msra.mxu0 0.0
    %112 = vmatprep.subr.mxu0 0.0
    %113 = vmatpush1.msra.mxu0 0.0
    %114 = vmatprep.subr.mxu0 0.0
    %115 = vmatpush1.msra.mxu0 0.0
    %116 = vmatprep.subr.mxu0 0.0
    %117 = vmatpush1.msra.mxu0 0.0
    %118 = vmatprep.subr.mxu0 0.0
    %119 = vmatpush1.msra.mxu0 0.0
    %120 = vmatprep.subr.mxu0 0.0
    %121 = vmatpush1.msra.mxu0 0.0
    %122 = vmatprep.subr.mxu0 0.0
    %123 = vmatpush1.msra.mxu0 0.0
    %124 = vmatprep.subr.mxu0 0.0
    %125 = vmatpush1.msra.mxu0 0.0
    %126 = vmatprep.subr.mxu0 0.0
    %127 = vmatpush1.msra.mxu0 0.0
    %128 = vmatprep.subr.mxu0 0.0
    %129 = vmatpush1.msra.mxu0 0.0
    %130 = vmatprep.subr.mxu0 0.0
    %131 = vmatpush1.msra.mxu0 0.0
    %132 = vmatprep.mubr.f32.mxu0 0.0
    %133 = vmatmul.mubr.f32.gmra.mrb[0].mxu0 %v63
    %v134 = vpop.f32.mrb[0].mxu0
    %v135 = vadd.f32 %v59, %v134
    %v136 = vpop.f32.mrb[0].mxu0
    %137 = vmatprep.mubr.f32.mxu0 0.0
    %138 = vmatmul.mubr.f32.gmra.mrb[0].mxu0 %v66
    %v139 = vpop.f32.mrb[0].mxu0
    %v140 = vadd.f32 %v59, %v139
    %v141 = vpop.f32.mrb[0].mxu0
    %142 = vdwg.mxu0
    %vm143 = vcmask 130048
    %v145 = vsel %vm143, %v47, 0
    %v148 = vsel %vm143, %v48, 0
    %150 = vmatprep.subr.mxu0 0.0
    %151 = vmatpush1.msra.mxu0 %v135
    %152 = vmatprep.subr.mxu0 0.0
    %153 = vmatpush1.msra.mxu0 %v140
    %154 = vmatprep.subr.mxu0 0.0
    %155 = vmatpush1.msra.mxu0 0.0
    %156 = vmatprep.subr.mxu0 0.0
    %157 = vmatpush1.msra.mxu0 0.0
    %158 = vmatprep.subr.mxu0 0.0
    %159 = vmatpush1.msra.mxu0 0.0
    %160 = vmatprep.subr.mxu0 0.0
    %161 = vmatpush1.msra.mxu0 0.0
    %162 = vmatprep.subr.mxu0 0.0
    %163 = vmatpush1.msra.mxu0 0.0
    %164 = vmatprep.subr.mxu0 0.0
    %165 = vmatpush1.msra.mxu0 0.0
    %166 = vmatprep.subr.mxu0 0.0
    %167 = vmatpush1.msra.mxu0 0.0
    %168 = vmatprep.subr.mxu0 0.0
    %169 = vmatpush1.msra.mxu0 0.0
    %170 = vmatprep.subr.mxu0 0.0
    %171 = vmatpush1.msra.mxu0 0.0
    %172 = vmatprep.subr.mxu0 0.0
    %173 = vmatpush1.msra.mxu0 0.0
    %174 = vmatprep.subr.mxu0 0.0
    %175 = vmatpush1.msra.mxu0 0.0
    %176 = vmatprep.subr.mxu0 0.0
    %177 = vmatpush1.msra.mxu0 0.0
    %178 = vmatprep.subr.mxu0 0.0
    %179 = vmatpush1.msra.mxu0 0.0
    %180 = vmatprep.subr.mxu0 0.0
    %181 = vmatpush1.msra.mxu0 0.0
    %182 = vmatprep.subr.mxu0 0.0
    %183 = vmatpush1.msra.mxu0 0.0
    %184 = vmatprep.subr.mxu0 0.0
    %185 = vmatpush1.msra.mxu0 0.0
    %186 = vmatprep.subr.mxu0 0.0
    %187 = vmatpush1.msra.mxu0 0.0
    %188 = vmatprep.subr.mxu0 0.0
    %189 = vmatpush1.msra.mxu0 0.0
    %190 = vmatprep.subr.mxu0 0.0
    %191 = vmatpush1.msra.mxu0 0.0
    %192 = vmatprep.subr.mxu0 0.0
    %193 = vmatpush1.msra.mxu0 0.0
    %194 = vmatprep.subr.mxu0 0.0
    %195 = vmatpush1.msra.mxu0 0.0
    %196 = vmatprep.subr.mxu0 0.0
    %197 = vmatpush1.msra.mxu0 0.0
    %198 = vmatprep.subr.mxu0 0.0
    %199 = vmatpush1.msra.mxu0 0.0
    %200 = vmatprep.subr.mxu0 0.0
    %201 = vmatpush1.msra.mxu0 0.0
    %202 = vmatprep.subr.mxu0 0.0
    %203 = vmatpush1.msra.mxu0 0.0
    %204 = vmatprep.subr.mxu0 0.0
    %205 = vmatpush1.msra.mxu0 0.0
    %206 = vmatprep.subr.mxu0 0.0
    %207 = vmatpush1.msra.mxu0 0.0
    %208 = vmatprep.subr.mxu0 0.0
    %209 = vmatpush1.msra.mxu0 0.0
    %210 = vmatprep.subr.mxu0 0.0
    %211 = vmatpush1.msra.mxu0 0.0
    %212 = vmatprep.subr.mxu0 0.0
    %213 = vmatpush1.msra.mxu0 0.0
    %214 = vmatprep.mubr.f32.mxu0 0.0
    %215 = vmatmul.mubr.f32.gmra.mrb[0].mxu0 %v145
    %v216 = vpop.f32.mrb[0].mxu0
    %v217 = vadd.f32 0.0, %v216
    %v218 = vpop.f32.mrb[0].mxu0
    %219 = vmatprep.mubr.f32.mxu0 0.0
    %220 = vmatmul.mubr.f32.gmra.mrb[0].mxu0 %v148
    %v221 = vpop.f32.mrb[0].mxu0
    %v222 = vadd.f32 0.0, %v221
    %v223 = vpop.f32.mrb[0].mxu0
    %224 = vdwg.mxu0
    %v225 = vmax.f32 %v217, 0.0
    %v226 = vmax.f32 %v222, 0.0
    %v227 = vld [vmem:[%s6] sm:$0xff]
    %v228 = vld [vmem:[%s6 + $0x8] sm:$0xff]
    %v229 = vld [vmem:[%s6 + $0x10] sm:$0xff]
    %v230 = vld [vmem:[%s6 + $0x18] sm:$0xff]
    %v231 = vld [vmem:[%s6 + $0x20] sm:$0xff]
    %v232 = vld [vmem:[%s6 + $0x28] sm:$0xff]
    %v233 = vld [vmem:[%s6 + $0x30] sm:$0xff]
    %v234 = vld [vmem:[%s6 + $0x38] sm:$0xff]
    %v235 = vld [vmem:[%s6 + $0x40] sm:$0xff]
    %v236 = vld [vmem:[%s6 + $0x48] sm:$0xff]
    %v237 = vld [vmem:[%s6 + $0x50] sm:$0xff]
    %v238 = vld [vmem:[%s6 + $0x58] sm:$0xff]
    %v239 = vld [vmem:[%s6 + $0x60] sm:$0xff]
    %v240 = vld [vmem:[%s6 + $0x68] sm:$0xff]
    %v241 = vld [vmem:[%s6 + $0x70] sm:$0xff]
    %v242 = vld [vmem:[%s6 + $0x78] sm:$0xff]
    %v243 = vld [vmem:[%s7] sm:$0x1]
    %v245 = vlaneseq
    %v246 = vshrl.u32 %v245, 7
    %v247 = vsub.s32 0, %v246
    %v248 = vrot.slane %v243, %v247
    %250 = vmatprep.subr.mxu0 0.0
    %251 = vmatpush1.msra.mxu0 %v227
    %252 = vmatprep.subr.mxu0 0.0
    %253 = vmatpush1.msra.mxu0 %v228
    %254 = vmatprep.subr.mxu0 0.0
    %255 = vmatpush1.msra.mxu0 %v229
    %256 = vmatprep.subr.mxu0 0.0
    %257 = vmatpush1.msra.mxu0 %v230
    %258 = vmatprep.subr.mxu0 0.0
    %259 = vmatpush1.msra.mxu0 %v231
    %260 = vmatprep.subr.mxu0 0.0
    %261 = vmatpush1.msra.mxu0 %v232
    %262 = vmatprep.subr.mxu0 0.0
    %263 = vmatpush1.msra.mxu0 %v233
    %264 = vmatprep.subr.mxu0 0.0
    %265 = vmatpush1.msra.mxu0 %v234
    %266 = vmatprep.subr.mxu0 0.0
    %267 = vmatpush1.msra.mxu0 %v235
    %268 = vmatprep.subr.mxu0 0.0
    %269 = vmatpush1.msra.mxu0 %v236
    %270 = vmatprep.subr.mxu0 0.0
    %271 = vmatpush1.msra.mxu0 %v237
    %272 = vmatprep.subr.mxu0 0.0
    %273 = vmatpush1.msra.mxu0 %v238
    %274 = vmatprep.subr.mxu0 0.0
    %275 = vmatpush1.msra.mxu0 %v239
    %276 = vmatprep.subr.mxu0 0.0
    %277 = vmatpush1.msra.mxu0 %v240
    %278 = vmatprep.subr.mxu0 0.0
    %279 = vmatpush1.msra.mxu0 %v241
    %280 = vmatprep.subr.mxu0 0.0
    %281 = vmatpush1.msra.mxu0 %v242
    %282 = vmatprep.subr.mxu0 0.0
    %283 = vmatpush1.msra.mxu0 0.0
    %284 = vmatprep.subr.mxu0 0.0
    %285 = vmatpush1.msra.mxu0 0.0
    %286 = vmatprep.subr.mxu0 0.0
    %287 = vmatpush1.msra.mxu0 0.0
    %288 = vmatprep.subr.mxu0 0.0
    %289 = vmatpush1.msra.mxu0 0.0
    %290 = vmatprep.subr.mxu0 0.0
    %291 = vmatpush1.msra.mxu0 0.0
    %292 = vmatprep.subr.mxu0 0.0
    %293 = vmatpush1.msra.mxu0 0.0
    %294 = vmatprep.subr.mxu0 0.0
    %295 = vmatpush1.msra.mxu0 0.0
    %296 = vmatprep.subr.mxu0 0.0
    %297 = vmatpush1.msra.mxu0 0.0
    %298 = vmatprep.subr.mxu0 0.0
    %299 = vmatpush1.msra.mxu0 0.0
    %300 = vmatprep.subr.mxu0 0.0
    %301 = vmatpush1.msra.mxu0 0.0
    %302 = vmatprep.subr.mxu0 0.0
    %303 = vmatpush1.msra.mxu0 0.0
    %304 = vmatprep.subr.mxu0 0.0
    %305 = vmatpush1.msra.mxu0 0.0
    %306 = vmatprep.subr.mxu0 0.0
    %307 = vmatpush1.msra.mxu0 0.0
    %308 = vmatprep.subr.mxu0 0.0
    %309 = vmatpush1.msra.mxu0 0.0
    %310 = vmatprep.subr.mxu0 0.0
    %311 = vmatpush1.msra.mxu0 0.0
    %312 = vmatprep.subr.mxu0 0.0
    %313 = vmatpush1.msra.mxu0 0.0
    %314 = vmatprep.mubr.f32.mxu0 0.0
    %315 = vmatmul.mubr.f32.gmra.mrb[0].mxu0 %v225
    %v316 = vpop.f32.mrb[0].mxu0
    %v317 = vadd.f32 %v248, %v316
    %v318 = vpop.f32.mrb[0].mxu0
    %319 = vmatprep.mubr.f32.mxu0 0.0
    %320 = vmatmul.mubr.f32.gmra.mrb[0].mxu0 %v226
    %v321 = vpop.f32.mrb[0].mxu0
    %v322 = vadd.f32 %v248, %v321
    %v323 = vpop.f32.mrb[0].mxu0
    %324 = vdwg.mxu0
    %325 = vmatprep.subr.mxu0 0.0
    %326 = vmatpush1.msra.mxu0 %v317
    %327 = vmatprep.subr.mxu0 0.0
    %328 = vmatpush1.msra.mxu0 %v322
    %329 = vmatprep.subr.mxu0 0.0
    %330 = vmatpush1.msra.mxu0 0.0
    %331 = vmatprep.subr.mxu0 0.0
    %332 = vmatpush1.msra.mxu0 0.0
    %333 = vmatprep.subr.mxu0 0.0
    %334 = vmatpush1.msra.mxu0 0.0
    %335 = vmatprep.subr.mxu0 0.0
    %336 = vmatpush1.msra.mxu0 0.0
    %337 = vmatprep.subr.mxu0 0.0
    %338 = vmatpush1.msra.mxu0 0.0
    %339 = vmatprep.subr.mxu0 0.0
    %340 = vmatpush1.msra.mxu0 0.0
    %341 = vmatprep.subr.mxu0 0.0
    %342 = vmatpush1.msra.mxu0 0.0
    %343 = vmatprep.subr.mxu0 0.0
    %344 = vmatpush1.msra.mxu0 0.0
    %345 = vmatprep.subr.mxu0 0.0
    %346 = vmatpush1.msra.mxu0 0.0
    %347 = vmatprep.subr.mxu0 0.0
    %348 = vmatpush1.msra.mxu0 0.0
    %349 = vmatprep.subr.mxu0 0.0
    %350 = vmatpush1.msra.mxu0 0.0
    %351 = vmatprep.subr.mxu0 0.0
    %352 = vmatpush1.msra.mxu0 0.0
    %353 = vmatprep.subr.mxu0 0.0
    %354 = vmatpush1.msra.mxu0 0.0
    %355 = vmatprep.subr.mxu0 0.0
    %356 = vmatpush1.msra.mxu0 0.0
    %357 = vmatprep.subr.mxu0 0.0
    %358 = vmatpush1.msra.mxu0 0.0
    %359 = vmatprep.subr.mxu0 0.0
    %360 = vmatpush1.msra.mxu0 0.0
    %361 = vmatprep.subr.mxu0 0.0
    %362 = vmatpush1.msra.mxu0 0.0
    %363 = vmatprep.subr.mxu0 0.0
    %364 = vmatpush1.msra.mxu0 0.0
    %365 = vmatprep.subr.mxu0 0.0
    %366 = vmatpush1.msra.mxu0 0.0
    %367 = vmatprep.subr.mxu0 0.0
    %368 = vmatpush1.msra.mxu0 0.0
    %369 = vmatprep.subr.mxu0 0.0
    %370 = vmatpush1.msra.mxu0 0.0
    %371 = vmatprep.subr.mxu0 0.0
    %372 = vmatpush1.msra.mxu0 0.0
    %373 = vmatprep.subr.mxu0 0.0
    %374 = vmatpush1.msra.mxu0 0.0
    %375 = vmatprep.subr.mxu0 0.0
    %376 = vmatpush1.msra.mxu0 0.0
    %377 = vmatprep.subr.mxu0 0.0
    %378 = vmatpush1.msra.mxu0 0.0
    %379 = vmatprep.subr.mxu0 0.0
    %380 = vmatpush1.msra.mxu0 0.0
    %381 = vmatprep.subr.mxu0 0.0
    %382 = vmatpush1.msra.mxu0 0.0
    %383 = vmatprep.subr.mxu0 0.0
    %384 = vmatpush1.msra.mxu0 0.0
    %385 = vmatprep.subr.mxu0 0.0
    %386 = vmatpush1.msra.mxu0 0.0
    %387 = vmatprep.subr.mxu0 0.0
    %388 = vmatpush1.msra.mxu0 0.0
    %389 = vmatprep.mubr.f32.mxu0 0.0
    %390 = vmatmul.mubr.f32.gmra.mrb[0].mxu0 %v145
    %v391 = vpop.f32.mrb[0].mxu0
    %v392 = vadd.f32 0.0, %v391
    %v393 = vpop.f32.mrb[0].mxu0
    %394 = vmatprep.mubr.f32.mxu0 0.0
    %395 = vmatmul.mubr.f32.gmra.mrb[0].mxu0 %v148
    %v396 = vpop.f32.mrb[0].mxu0
    %v397 = vadd.f32 0.0, %v396
    %v398 = vpop.f32.mrb[0].mxu0
    %399 = vdwg.mxu0
    %v400 = vsub.f32 0.0, %v392
    %v401 = vsub.f32 0.0, %v397
    %v402 = vmul.f32 %v400, 1.442695
    %v403 = vpow.pop %v402
    %v404 = vmul.f32 %v401, 1.442695
    %v405 = vpow.pop %v404
    %v406 = vadd.f32 %v403, 1.0
    %v407 = vadd.f32 %v405, 1.0
    %v408 = vrcp.pop %v406
    %v409 = vrcp.pop %v407
    %v410 = vld [vmem:[%s8] sm:$0xff]
    %v411 = vld [vmem:[%s8 + $0x8] sm:$0xff]
    %v412 = vld [vmem:[%s9] sm:$0x1]
    %v414 = vlaneseq
    %v415 = vshrl.u32 %v414, 7
    %v416 = vsub.s32 0, %v415
    %v417 = vrot.slane %v412, %v416
    %v420 = vsel %vm143, %v52, 0
    %422 = vmatprep.subr.mxu0 0.0
    %423 = vmatpush1.msra.mxu0 %v410
    %424 = vmatprep.subr.mxu0 0.0
    %425 = vmatpush1.msra.mxu0 %v411
    %426 = vmatprep.subr.mxu0 0.0
    %427 = vmatpush1.msra.mxu0 0.0
    %428 = vmatprep.subr.mxu0 0.0
    %429 = vmatpush1.msra.mxu0 0.0
    %430 = vmatprep.subr.mxu0 0.0
    %431 = vmatpush1.msra.mxu0 0.0
    %432 = vmatprep.subr.mxu0 0.0
    %433 = vmatpush1.msra.mxu0 0.0
    %434 = vmatprep.subr.mxu0 0.0
    %435 = vmatpush1.msra.mxu0 0.0
    %436 = vmatprep.subr.mxu0 0.0
    %437 = vmatpush1.msra.mxu0 0.0
    %438 = vmatprep.subr.mxu0 0.0
    %439 = vmatpush1.msra.mxu0 0.0
    %440 = vmatprep.subr.mxu0 0.0
    %441 = vmatpush1.msra.mxu0 0.0
    %442 = vmatprep.subr.mxu0 0.0
    %443 = vmatpush1.msra.mxu0 0.0
    %444 = vmatprep.subr.mxu0 0.0
    %445 = vmatpush1.msra.mxu0 0.0
    %446 = vmatprep.subr.mxu0 0.0
    %447 = vmatpush1.msra.mxu0 0.0
    %448 = vmatprep.subr.mxu0 0.0
    %449 = vmatpush1.msra.mxu0 0.0
    %450 = vmatprep.subr.mxu0 0.0
    %451 = vmatpush1.msra.mxu0 0.0
    %452 = vmatprep.subr.mxu0 0.0
    %453 = vmatpush1.msra.mxu0 0.0
    %454 = vmatprep.subr.mxu0 0.0
    %455 = vmatpush1.msra.mxu0 0.0
    %456 = vmatprep.subr.mxu0 0.0
    %457 = vmatpush1.msra.mxu0 0.0
    %458 = vmatprep.subr.mxu0 0.0
    %459 = vmatpush1.msra.mxu0 0.0
    %460 = vmatprep.subr.mxu0 0.0
    %461 = vmatpush1.msra.mxu0 0.0
    %462 = vmatprep.subr.mxu0 0.0
    %463 = vmatpush1.msra.mxu0 0.0
    %464 = vmatprep.subr.mxu0 0.0
    %465 = vmatpush1.msra.mxu0 0.0
    %466 = vmatprep.subr.mxu0 0.0
    %467 = vmatpush1.msra.mxu0 0.0
    %468 = vmatprep.subr.mxu0 0.0
    %469 = vmatpush1.msra.mxu0 0.0
    %470 = vmatprep.subr.mxu0 0.0
    %471 = vmatpush1.msra.mxu0 0.0
    %472 = vmatprep.subr.mxu0 0.0
    %473 = vmatpush1.msra.mxu0 0.0
    %474 = vmatprep.subr.mxu0 0.0
    %475 = vmatpush1.msra.mxu0 0.0
    %476 = vmatprep.subr.mxu0 0.0
    %477 = vmatpush1.msra.mxu0 0.0
    %478 = vmatprep.subr.mxu0 0.0
    %479 = vmatpush1.msra.mxu0 0.0
    %480 = vmatprep.subr.mxu0 0.0
    %481 = vmatpush1.msra.mxu0 0.0
    %482 = vmatprep.subr.mxu0 0.0
    %483 = vmatpush1.msra.mxu0 0.0
    %484 = vmatprep.subr.mxu0 0.0
    %485 = vmatpush1.msra.mxu0 0.0
    %486 = vmatprep.mubr.f32.mxu0 0.0
    %487 = vmatmul.mubr.f32.gmra.mrb[0].mxu0 %v420
    %v488 = vpop.f32.mrb[0].mxu0
    %v489 = vadd.f32 %v417, %v488
    %v490 = vpop.f32.mrb[0].mxu0
    %491 = vdwg.mxu0
    %v493 = vsel %vm61, %v49, 0
    %495 = vmatprep.subr.mxu0 0.0
    %496 = vmatpush1.msra.mxu0 %v489
    %497 = vmatprep.subr.mxu0 0.0
    %498 = vmatpush1.msra.mxu0 0.0
    %499 = vmatprep.subr.mxu0 0.0
    %500 = vmatpush1.msra.mxu0 0.0
    %501 = vmatprep.subr.mxu0 0.0
    %502 = vmatpush1.msra.mxu0 0.0
    %503 = vmatprep.subr.mxu0 0.0
    %504 = vmatpush1.msra.mxu0 0.0
    %505 = vmatprep.subr.mxu0 0.0
    %506 = vmatpush1.msra.mxu0 0.0
    %507 = vmatprep.subr.mxu0 0.0
    %508 = vmatpush1.msra.mxu0 0.0
    %509 = vmatprep.subr.mxu0 0.0
    %510 = vmatpush1.msra.mxu0 0.0
    %511 = vmatprep.subr.mxu0 0.0
    %512 = vmatpush1.msra.mxu0 0.0
    %513 = vmatprep.subr.mxu0 0.0
    %514 = vmatpush1.msra.mxu0 0.0
    %515 = vmatprep.subr.mxu0 0.0
    %516 = vmatpush1.msra.mxu0 0.0
    %517 = vmatprep.subr.mxu0 0.0
    %518 = vmatpush1.msra.mxu0 0.0
    %519 = vmatprep.subr.mxu0 0.0
    %520 = vmatpush1.msra.mxu0 0.0
    %521 = vmatprep.subr.mxu0 0.0
    %522 = vmatpush1.msra.mxu0 0.0
    %523 = vmatprep.subr.mxu0 0.0
    %524 = vmatpush1.msra.mxu0 0.0
    %525 = vmatprep.subr.mxu0 0.0
    %526 = vmatpush1.msra.mxu0 0.0
    %527 = vmatprep.subr.mxu0 0.0
    %528 = vmatpush1.msra.mxu0 0.0
    %529 = vmatprep.subr.mxu0 0.0
    %530 = vmatpush1.msra.mxu0 0.0
    %531 = vmatprep.subr.mxu0 0.0
    %532 = vmatpush1.msra.mxu0 0.0
    %533 = vmatprep.subr.mxu0 0.0
    %534 = vmatpush1.msra.mxu0 0.0
    %535 = vmatprep.subr.mxu0 0.0
    %536 = vmatpush1.msra.mxu0 0.0
    %537 = vmatprep.subr.mxu0 0.0
    %538 = vmatpush1.msra.mxu0 0.0
    %539 = vmatprep.subr.mxu0 0.0
    %540 = vmatpush1.msra.mxu0 0.0
    %541 = vmatprep.subr.mxu0 0.0
    %542 = vmatpush1.msra.mxu0 0.0
    %543 = vmatprep.subr.mxu0 0.0
    %544 = vmatpush1.msra.mxu0 0.0
    %545 = vmatprep.subr.mxu0 0.0
    %546 = vmatpush1.msra.mxu0 0.0
    %547 = vmatprep.subr.mxu0 0.0
    %548 = vmatpush1.msra.mxu0 0.0
    %549 = vmatprep.subr.mxu0 0.0
    %550 = vmatpush1.msra.mxu0 0.0
    %551 = vmatprep.subr.mxu0 0.0
    %552 = vmatpush1.msra.mxu0 0.0
    %553 = vmatprep.subr.mxu0 0.0
    %554 = vmatpush1.msra.mxu0 0.0
    %555 = vmatprep.subr.mxu0 0.0
    %556 = vmatpush1.msra.mxu0 0.0
    %557 = vmatprep.subr.mxu0 0.0
    %558 = vmatpush1.msra.mxu0 0.0
    %559 = vmatprep.mubr.f32.mxu0 0.0
    %560 = vmatmul.mubr.f32.gmra.mrb[0].mxu0 %v493
    %v561 = vpop.f32.mrb[0].mxu0
    %v562 = vadd.f32 0.0, %v561
    %v563 = vpop.f32.mrb[0].mxu0
    %564 = vdwg.mxu0
    %v565 = vmax.f32 %v562, 0.0
    %v566 = vld [vmem:[%s10] sm:$0xff]
    %v567 = vld [vmem:[%s10 + $0x8] sm:$0xff]
    %v568 = vld [vmem:[%s10 + $0x10] sm:$0xff]
    %v569 = vld [vmem:[%s10 + $0x18] sm:$0xff]
    %v570 = vld [vmem:[%s10 + $0x20] sm:$0xff]
    %v571 = vld [vmem:[%s10 + $0x28] sm:$0xff]
    %v572 = vld [vmem:[%s10 + $0x30] sm:$0xff]
    %v573 = vld [vmem:[%s10 + $0x38] sm:$0xff]
    %v574 = vld [vmem:[%s10 + $0x40] sm:$0xff]
    %v575 = vld [vmem:[%s10 + $0x48] sm:$0xff]
    %v576 = vld [vmem:[%s10 + $0x50] sm:$0xff]
    %v577 = vld [vmem:[%s10 + $0x58] sm:$0xff]
    %v578 = vld [vmem:[%s10 + $0x60] sm:$0xff]
    %v579 = vld [vmem:[%s10 + $0x68] sm:$0xff]
    %v580 = vld [vmem:[%s10 + $0x70] sm:$0xff]
    %v581 = vld [vmem:[%s10 + $0x78] sm:$0xff]
    %v582 = vld [vmem:[%s11] sm:$0x1]
    %v584 = vlaneseq
    %v585 = vshrl.u32 %v584, 7
    %v586 = vsub.s32 0, %v585
    %v587 = vrot.slane %v582, %v586
    %589 = vmatprep.subr.mxu0 0.0
    %590 = vmatpush1.msra.mxu0 %v566
    %591 = vmatprep.subr.mxu0 0.0
    %592 = vmatpush1.msra.mxu0 %v567
    %593 = vmatprep.subr.mxu0 0.0
    %594 = vmatpush1.msra.mxu0 %v568
    %595 = vmatprep.subr.mxu0 0.0
    %596 = vmatpush1.msra.mxu0 %v569
    %597 = vmatprep.subr.mxu0 0.0
    %598 = vmatpush1.msra.mxu0 %v570
    %599 = vmatprep.subr.mxu0 0.0
    %600 = vmatpush1.msra.mxu0 %v571
    %601 = vmatprep.subr.mxu0 0.0
    %602 = vmatpush1.msra.mxu0 %v572
    %603 = vmatprep.subr.mxu0 0.0
    %604 = vmatpush1.msra.mxu0 %v573
    %605 = vmatprep.subr.mxu0 0.0
    %606 = vmatpush1.msra.mxu0 %v574
    %607 = vmatprep.subr.mxu0 0.0
    %608 = vmatpush1.msra.mxu0 %v575
    %609 = vmatprep.subr.mxu0 0.0
    %610 = vmatpush1.msra.mxu0 %v576
    %611 = vmatprep.subr.mxu0 0.0
    %612 = vmatpush1.msra.mxu0 %v577
    %613 = vmatprep.subr.mxu0 0.0
    %614 = vmatpush1.msra.mxu0 %v578
    %615 = vmatprep.subr.mxu0 0.0
    %616 = vmatpush1.msra.mxu0 %v579
    %617 = vmatprep.subr.mxu0 0.0
    %618 = vmatpush1.msra.mxu0 %v580
    %619 = vmatprep.subr.mxu0 0.0
    %620 = vmatpush1.msra.mxu0 %v581
    %621 = vmatprep.subr.mxu0 0.0
    %622 = vmatpush1.msra.mxu0 0.0
    %623 = vmatprep.subr.mxu0 0.0
    %624 = vmatpush1.msra.mxu0 0.0
    %625 = vmatprep.subr.mxu0 0.0
    %626 = vmatpush1.msra.mxu0 0.0
    %627 = vmatprep.subr.mxu0 0.0
    %628 = vmatpush1.msra.mxu0 0.0
    %629 = vmatprep.subr.mxu0 0.0
    %630 = vmatpush1.msra.mxu0 0.0
    %631 = vmatprep.subr.mxu0 0.0
    %632 = vmatpush1.msra.mxu0 0.0
    %633 = vmatprep.subr.mxu0 0.0
    %634 = vmatpush1.msra.mxu0 0.0
    %635 = vmatprep.subr.mxu0 0.0
    %636 = vmatpush1.msra.mxu0 0.0
    %637 = vmatprep.subr.mxu0 0.0
    %638 = vmatpush1.msra.mxu0 0.0
    %639 = vmatprep.subr.mxu0 0.0
    %640 = vmatpush1.msra.mxu0 0.0
    %641 = vmatprep.subr.mxu0 0.0
    %642 = vmatpush1.msra.mxu0 0.0
    %643 = vmatprep.subr.mxu0 0.0
    %644 = vmatpush1.msra.mxu0 0.0
    %645 = vmatprep.subr.mxu0 0.0
    %646 = vmatpush1.msra.mxu0 0.0
    %647 = vmatprep.subr.mxu0 0.0
    %648 = vmatpush1.msra.mxu0 0.0
    %649 = vmatprep.subr.mxu0 0.0
    %650 = vmatpush1.msra.mxu0 0.0
    %651 = vmatprep.subr.mxu0 0.0
    %652 = vmatpush1.msra.mxu0 0.0
    %653 = vmatprep.mubr.f32.mxu0 0.0
    %654 = vmatmul.mubr.f32.gmra.mrb[0].mxu0 %v565
    %v655 = vpop.f32.mrb[0].mxu0
    %v656 = vadd.f32 %v587, %v655
    %v657 = vpop.f32.mrb[0].mxu0
    %658 = vdwg.mxu0
    %659 = vmatprep.subr.mxu0 0.0
    %660 = vmatpush1.msra.mxu0 %v656
    %661 = vmatprep.subr.mxu0 0.0
    %662 = vmatpush1.msra.mxu0 0.0
    %663 = vmatprep.subr.mxu0 0.0
    %664 = vmatpush1.msra.mxu0 0.0
    %665 = vmatprep.subr.mxu0 0.0
    %666 = vmatpush1.msra.mxu0 0.0
    %667 = vmatprep.subr.mxu0 0.0
    %668 = vmatpush1.msra.mxu0 0.0
    %669 = vmatprep.subr.mxu0 0.0
    %670 = vmatpush1.msra.mxu0 0.0
    %671 = vmatprep.subr.mxu0 0.0
    %672 = vmatpush1.msra.mxu0 0.0
    %673 = vmatprep.subr.mxu0 0.0
    %674 = vmatpush1.msra.mxu0 0.0
    %675 = vmatprep.subr.mxu0 0.0
    %676 = vmatpush1.msra.mxu0 0.0
    %677 = vmatprep.subr.mxu0 0.0
    %678 = vmatpush1.msra.mxu0 0.0
    %679 = vmatprep.subr.mxu0 0.0
    %680 = vmatpush1.msra.mxu0 0.0
    %681 = vmatprep.subr.mxu0 0.0
    %682 = vmatpush1.msra.mxu0 0.0
    %683 = vmatprep.subr.mxu0 0.0
    %684 = vmatpush1.msra.mxu0 0.0
    %685 = vmatprep.subr.mxu0 0.0
    %686 = vmatpush1.msra.mxu0 0.0
    %687 = vmatprep.subr.mxu0 0.0
    %688 = vmatpush1.msra.mxu0 0.0
    %689 = vmatprep.subr.mxu0 0.0
    %690 = vmatpush1.msra.mxu0 0.0
    %691 = vmatprep.subr.mxu0 0.0
    %692 = vmatpush1.msra.mxu0 0.0
    %693 = vmatprep.subr.mxu0 0.0
    %694 = vmatpush1.msra.mxu0 0.0
    %695 = vmatprep.subr.mxu0 0.0
    %696 = vmatpush1.msra.mxu0 0.0
    %697 = vmatprep.subr.mxu0 0.0
    %698 = vmatpush1.msra.mxu0 0.0
    %699 = vmatprep.subr.mxu0 0.0
    %700 = vmatpush1.msra.mxu0 0.0
    %701 = vmatprep.subr.mxu0 0.0
    %702 = vmatpush1.msra.mxu0 0.0
    %703 = vmatprep.subr.mxu0 0.0
    %704 = vmatpush1.msra.mxu0 0.0
    %705 = vmatprep.subr.mxu0 0.0
    %706 = vmatpush1.msra.mxu0 0.0
    %707 = vmatprep.subr.mxu0 0.0
    %708 = vmatpush1.msra.mxu0 0.0
    %709 = vmatprep.subr.mxu0 0.0
    %710 = vmatpush1.msra.mxu0 0.0
    %711 = vmatprep.subr.mxu0 0.0
    %712 = vmatpush1.msra.mxu0 0.0
    %713 = vmatprep.subr.mxu0 0.0
    %714 = vmatpush1.msra.mxu0 0.0
    %715 = vmatprep.subr.mxu0 0.0
    %716 = vmatpush1.msra.mxu0 0.0
    %717 = vmatprep.subr.mxu0 0.0
    %718 = vmatpush1.msra.mxu0 0.0
    %719 = vmatprep.subr.mxu0 0.0
    %720 = vmatpush1.msra.mxu0 0.0
    %721 = vmatprep.subr.mxu0 0.0
    %722 = vmatpush1.msra.mxu0 0.0
    %723 = vmatprep.mubr.f32.mxu0 0.0
    %724 = vmatmul.mubr.f32.gmra.mrb[0].mxu0 %v493
    %v725 = vpop.f32.mrb[0].mxu0
    %v726 = vadd.f32 0.0, %v725
    %v727 = vpop.f32.mrb[0].mxu0
    %728 = vdwg.mxu0
    %v729 = vsub.f32 0.0, %v726
    %v730 = vmul.f32 %v729, 1.442695
    %v731 = vpow.pop %v730
    %v732 = vadd.f32 %v731, 1.0
    %v733 = vrcp.pop %v732
    %734 = vst [vmem:[%s12] sm:$0xff] %v408
    %735 = vst [vmem:[%s12 + $0x8] sm:$0xff] %v409
    %736 = vst [vmem:[#allocation2] sm:$0xff] %v225
    %737 = vst [vmem:[#allocation2 + $0x8] sm:$0xff] %v226
    %738 = vst [vmem:[#allocation4] sm:$0xff] %v733
    %739 = vst [vmem:[#allocation6] sm:$0xff] %v565
    // Predicated region
    $region50: #{lpn_forward.1} parent=1 // pred_check
      _
    $region51: #{lpn_forward.1} parent=1 // pred_check_branch
      %741 = sbr.rel (0) target = $region53
    $region52: #{lpn_forward.1} parent=1 // pred_region
      _
    $region53: #{lpn_forward.1} parent=1 // pred_fallthru
      _
    // Predicated region
    $region54: #{lpn_forward.1} parent=1 // pred_check
      _
    $region55: #{lpn_forward.1} parent=1 // pred_check_branch
      %743 = sbr.rel (0) target = $region57
    $region56: #{lpn_forward.1} parent=1 // pred_region
      %s745 = ssub.s32 256, 256
      %746 = vsyncadd [#allocation3], %s745
      %s747 = sshll.u32 [#allocation2], 4
      %s748 = int_to_ptr.vmem [resolvable:$true] %s747
      %753 = dma.vmem_to_hbm [thread:$0]  %s748, 256, %s13, [#allocation3], 128, 128, 8
    $region57: #{lpn_forward.1} parent=1 // pred_fallthru
      _
    // Predicated region
    $region58: #{lpn_forward.1} parent=1 // pred_check
      _
    $region59: #{lpn_forward.1} parent=1 // pred_check_branch
      %755 = sbr.rel (0) target = $region61
    $region60: #{lpn_forward.1} parent=1 // pred_region
      %s757 = ssub.s32 128, 128
      %758 = vsyncadd [#allocation5], %s757
      %s760 = sshll.u32 [#allocation4], 4
      %s761 = int_to_ptr.vmem [resolvable:$true] %s760
      %763 = dma.vmem_to_hbm [thread:$0]  %s761, 128, %s14, [#allocation5]
    $region61: #{lpn_forward.1} parent=1 // pred_fallthru
      _
    // Predicated region
    $region62: #{lpn_forward.1} parent=1 // pred_check
      _
    $region63: #{lpn_forward.1} parent=1 // pred_check_branch
      %765 = sbr.rel (0) target = $region65
    $region64: #{lpn_forward.1} parent=1 // pred_region
      %s767 = ssub.s32 128, 128
      %768 = vsyncadd [#allocation5], %s767
      %s770 = sshll.u32 [#allocation6], 4
      %s771 = int_to_ptr.vmem [resolvable:$true] %s770
      %773 = dma.vmem_to_hbm [thread:$0]  %s771, 128, %s15, [#allocation5]
    $region65: #{lpn_forward.1} parent=1 // pred_fallthru
      _
    // Predicated region
    $region66: #{lpn_forward.1} parent=1 // pred_check
      _
    $region67: #{lpn_forward.1} parent=1 // pred_check_branch
      %775 = sbr.rel (0) target = $region69
    $region68: #{lpn_forward.1} parent=1 // pred_region
      _
    $region69: #{lpn_forward.1} parent=1 // pred_fallthru
      _
    // Predicated region
    $region70: #{lpn_forward.1} parent=1 // pred_check
      _
    $region71: #{lpn_forward.1} parent=1 // pred_check_branch
      %777 = sbr.rel (0) target = $region73
    $region72: #{lpn_forward.1} parent=1 // pred_region
      %778 = dma.done [#allocation3], 256
    $region73: #{lpn_forward.1} parent=1 // pred_fallthru
      _
    // Predicated region
    $region74: #{lpn_forward.1} parent=1 // pred_check
      _
    $region75: #{lpn_forward.1} parent=1 // pred_check_branch
      %780 = sbr.rel (0) target = $region77
    $region76: #{lpn_forward.1} parent=1 // pred_region
      %781 = dma.done [#allocation5], 128
    $region77: #{lpn_forward.1} parent=1 // pred_fallthru
      _
    // Predicated region
    $region78: #{lpn_forward.1} parent=1 // pred_check
      _
    $region79: #{lpn_forward.1} parent=1 // pred_check_branch
      %783 = sbr.rel (0) target = $region81
    $region80: #{lpn_forward.1} parent=1 // pred_region
      %784 = dma.done [#allocation5], 128
    $region81: #{lpn_forward.1} parent=1 // pred_fallthru
      _
    %785 = vsyncpa [#allocation3], 1
    %786 = vsyncpa [#allocation5], 1

</llo_original>
